<compile_context>
chip_gen: v7x
topology: tpu7x:2x2x1
jax: 0.10.0
libtpu: 0.0.40
codegen_flags: <defaults>
</compile_context>

<pallas_src>
import jax
import jax.numpy as jnp
from jax.experimental import pallas as pl
from jax.experimental.pallas import tpu as pltpu

_NEG = -1e30          # mask value for padded logit lanes (finite, safe in f32)
_NUM_CLASSES = 10
_OUT_COLS = 16        # lane-padded output width written back to HBM


def _round_up(x, m):
    return ((x + m - 1) // m) * m


def _mlp_kernel(x_ref, w1_ref, w2_ref, w3_ref, b_ref, o_ref):
    """Fused 3-layer MLP forward for one batch tile.

    x_ref : (TB, 784)   f32   (batch-tiled, double-buffered; cast to bf16 in-kernel)
    w1_ref: (784, 128)  bf16  (resident across grid)
    w2_ref: (128, 128)  bf16
    w3_ref: (128, 128)  bf16  (zero-padded from 10 output cols)
    b_ref : (8, 128)    f32   row0=b1, row1=b2, row2=b3 (cols >= 10 are -1e30)
    o_ref : (TB, 16)    f32   log-probs; cols >= 10 are garbage, sliced off outside
    """
    b1 = b_ref[0:1, :]
    b2 = b_ref[1:2, :]
    b3 = b_ref[2:3, :]

    # fc1 + relu (bf16 operands, f32 accumulation on the MXU)
    xb = x_ref[...].astype(jnp.bfloat16)
    h1 = jnp.dot(xb, w1_ref[...], preferred_element_type=jnp.float32)
    h1 = jnp.maximum(h1 + b1, 0.0)

    # fc2 + relu
    h2 = jnp.dot(h1.astype(jnp.bfloat16), w2_ref[...],
                 preferred_element_type=jnp.float32)
    h2 = jnp.maximum(h2 + b2, 0.0)

    # fc3 (128 lanes; padded bias columns carry -1e30 so they never win the max and
    # contribute ~0 to the logsumexp)
    logits = jnp.dot(h2.astype(jnp.bfloat16), w3_ref[...],
                     preferred_element_type=jnp.float32) + b3

    # numerically stable log_softmax along the lane axis
    m = jnp.max(logits, axis=-1, keepdims=True)
    shifted = logits - m
    lse = jnp.log(jnp.sum(jnp.exp(shifted), axis=-1, keepdims=True))
    logp = shifted - lse

    # narrow writeback: only the first 16 lanes hit HBM
    o_ref[...] = logp[:, :_OUT_COLS].astype(o_ref.dtype)


def prepare_params(params):
    """One-time weight prep (run once, outside the per-call jitted forward)."""
    w1, b1, w2, b2, w3, b3 = params
    n_out = w3.shape[1]
    pad = 128 - n_out

    w1b = w1.astype(jnp.bfloat16)
    w2b = w2.astype(jnp.bfloat16)
    w3p = jnp.pad(w3, ((0, 0), (0, pad))).astype(jnp.bfloat16)

    b1f = b1.reshape(1, -1).astype(jnp.float32)
    b2f = b2.reshape(1, -1).astype(jnp.float32)
    b3f = jnp.pad(b3.reshape(1, -1).astype(jnp.float32), ((0, 0), (0, pad)),
                  constant_values=_NEG)
    bias = jnp.concatenate(
        [b1f, b2f, b3f, jnp.zeros((5, 128), jnp.float32)], axis=0)  # (8, 128)

    return (w1b, w2b, w3p, bias)


@jax.jit
def digit_classifier_forward(x, prepped):
    """x: (B, 1, 28, 28) or anything reshapeable to (-1, 784), f32.
    prepped: output of prepare_params. Returns (B, 10) f32 log-probs."""
    w1b, w2b, w3p, bias = prepped
    x2d = x.reshape(-1, 28 * 28).astype(jnp.float32)
    B = x2d.shape[0]

    # Pad batch only to a multiple of 16 (bf16 sublane packing); pick the largest
    # power-of-two tile that divides B_pad so there is no extra padding waste.
    B_pad = _round_up(max(B, 1), 16)
    TB = max(t for t in (1024, 512, 256, 128, 64, 32, 16) if B_pad % t == 0)
    if B_pad // TB == 1 and TB >= 32:
        TB //= 2  # ensure >= 2 grid steps so both v7x TensorCores get work
    if B_pad != B:
        x2d = jnp.pad(x2d, ((0, B_pad - B), (0, 0)))

    grid = (B_pad // TB,)
    resident = lambda shape: pl.BlockSpec(shape, lambda i: (0, 0))

    flops = 2 * B_pad * (784 * 128 + 128 * 128 + 128 * 128)
    bytes_accessed = (
        B_pad * 784 * 4                     # x (f32, cast in-kernel)
        + (784 * 128 + 2 * 128 * 128) * 2   # weights (bf16)
        + 8 * 128 * 4                       # packed biases (f32)
        + B_pad * _OUT_COLS * 4             # output (f32, 16 lanes)
    )
    transcendentals = B_pad * 129           # exp per lane + log per row

    out = pl.pallas_call(
        _mlp_kernel,
        out_shape=jax.ShapeDtypeStruct((B_pad, _OUT_COLS), jnp.float32),
        grid_spec=pltpu.PrefetchScalarGridSpec(
            num_scalar_prefetch=0,
            grid=grid,
            in_specs=[
                pl.BlockSpec((TB, 784), lambda i: (i, 0)),   # x: batch-tiled
                resident((784, 128)),                        # fc1 weights
                resident((128, 128)),                        # fc2 weights
                resident((128, 128)),                        # fc3 weights (padded)
                resident((8, 128)),                          # packed biases
            ],
            out_specs=pl.BlockSpec((TB, _OUT_COLS), lambda i: (i, 0)),
        ),
        compiler_params=pltpu.CompilerParams(
            dimension_semantics=("parallel",),
            vmem_limit_bytes=16 * 1024 * 1024,
        ),
        cost_estimate=pl.CostEstimate(
            flops=flops,
            transcendentals=transcendentals,
            bytes_accessed=bytes_accessed,
        ),
    )(x2d, w1b, w2b, w3p, bias)

    return out[:B, :_NUM_CLASSES]


def init_params(key):
    """Deterministic init mimicking nn.Linear default (uniform +-1/sqrt(fan_in)).

    Weights stored as (in_features, out_features), biases as (1, out_features)."""
    def linear(key, fan_in, fan_out):
        kw, kb = jax.random.split(key)
        bound = 1.0 / jnp.sqrt(fan_in)
        w = jax.random.uniform(kw, (fan_in, fan_out), jnp.float32, -bound, bound)
        b = jax.random.uniform(kb, (1, fan_out), jnp.float32, -bound, bound)
        return w, b

    k1, k2, k3 = jax.random.split(key, 3)
    w1, b1 = linear(k1, 28 * 28, 128)
    w2, b2 = linear(k2, 128, 128)
    w3, b3 = linear(k3, 128, 10)
    return (w1, b1, w2, b2, w3, b3)


def _reference(x, params):
    """Pure-JAX reference matching the kernel's numerics (bf16 operands, f32 accum)."""
    w1, b1, w2, b2, w3, b3 = params
    bf = lambda a: a.astype(jnp.bfloat16).astype(jnp.float32)
    x2d = bf(x.reshape(-1, 28 * 28))
    h1 = jnp.maximum(x2d @ bf(w1) + b1, 0.0)
    h2 = jnp.maximum(bf(h1) @ bf(w2) + b2, 0.0)
    logits = bf(h2) @ bf(w3) + b3
    return jax.nn.log_softmax(logits, axis=1)


if __name__ == "__main__":
    key = jax.random.PRNGKey(0)
    kx, kp = jax.random.split(key)

    # Small MNIST-like batch: (B=2, C=1, H=28, W=28)
    x = jax.random.normal(kx, (2, 1, 28, 28), dtype=jnp.float32)
    params = init_params(kp)
    prepped = prepare_params(params)  # one-time prep, outside the jitted forward

    out = digit_classifier_forward(x, prepped)
    out = jax.block_until_ready(out)

    ref = _reference(x, params)
    assert out.shape == (2, 10)
    assert jnp.allclose(out, ref, atol=1e-3, rtol=1e-3), "mismatch vs reference"
    # log_softmax sanity: rows sum (in prob space) to 1
    assert jnp.allclose(jnp.sum(jnp.exp(out), axis=1), 1.0, atol=1e-4)

    print("KERNEL_OK")
</pallas_src>

<mosaic_0001>
module attributes {stable_mosaic.version = 11 : i64} {
  func.func @_mlp_kernel(%arg0: i32, %arg1: memref<16x784xf32, #tpu.memory_space<vmem>>, %arg2: memref<784x128xbf16, #tpu.memory_space<vmem>>, %arg3: memref<128x128xbf16, #tpu.memory_space<vmem>>, %arg4: memref<128x128xbf16, #tpu.memory_space<vmem>>, %arg5: memref<8x128xf32, #tpu.memory_space<vmem>>, %arg6: memref<16x16xf32, #tpu.memory_space<vmem>>) attributes {dimension_semantics = [#tpu.dimension_semantics<parallel>], iteration_bounds = array<i64: 1>, scalar_prefetch = 0 : i64, scratch_operands = 0 : i64, tpu.core_type = #tpu.core_type<tc>, window_params = [{transform_indices = @transform_0, window_bounds = array<i64: 16, 784>}, {pipeline_mode = #tpu.pipeline_mode<synchronous>, transform_indices = @transform_1, window_bounds = array<i64: 784, 128>}, {pipeline_mode = #tpu.pipeline_mode<synchronous>, transform_indices = @transform_2, window_bounds = array<i64: 128, 128>}, {pipeline_mode = #tpu.pipeline_mode<synchronous>, transform_indices = @transform_3, window_bounds = array<i64: 128, 128>}, {pipeline_mode = #tpu.pipeline_mode<synchronous>, transform_indices = @transform_4, window_bounds = array<i64: 8, 128>}, {transform_indices = @transform_5, window_bounds = array<i64: 16, 16>}]} {
    %c0 = arith.constant 0 : index
    %c0_0 = arith.constant 0 : index
    %0 = vector.load %arg5[%c0, %c0_0] : memref<8x128xf32, #tpu.memory_space<vmem>>, vector<1x128xf32>
    %c1 = arith.constant 1 : index
    %c0_1 = arith.constant 0 : index
    %1 = vector.load %arg5[%c1, %c0_1] : memref<8x128xf32, #tpu.memory_space<vmem>>, vector<1x128xf32>
    %c2 = arith.constant 2 : index
    %c0_2 = arith.constant 0 : index
    %2 = vector.load %arg5[%c2, %c0_2] : memref<8x128xf32, #tpu.memory_space<vmem>>, vector<1x128xf32>
    %c0_3 = arith.constant 0 : index
    %c0_4 = arith.constant 0 : index
    %3 = vector.load %arg1[%c0_3, %c0_4] : memref<16x784xf32, #tpu.memory_space<vmem>>, vector<16x784xf32>
    %4 = arith.truncf %3 : vector<16x784xf32> to vector<16x784xbf16>
    %c0_5 = arith.constant 0 : index
    %c0_6 = arith.constant 0 : index
    %5 = vector.load %arg2[%c0_5, %c0_6] : memref<784x128xbf16, #tpu.memory_space<vmem>>, vector<784x128xbf16>
    %cst = arith.constant dense<0.000000e+00> : vector<16x128xf32>
    %6 = tpu.matmul %4, %5, %cst {dimension_numbers = #tpu.dot_dimension_numbers<[1], [0], [0], [1], [0, 0, 1, 1], [], []>} : vector<16x784xbf16>, vector<784x128xbf16>, vector<16x128xf32> -> vector<16x128xf32>
    %7 = vector.broadcast %0 : vector<1x128xf32> to vector<16x128xf32>
    %8 = arith.addf %6, %7 : vector<16x128xf32>
    %cst_7 = arith.constant 0.000000e+00 : f32
    %9 = vector.broadcast %cst_7 : f32 to vector<16x128xf32>
    %10 = arith.maximumf %8, %9 : vector<16x128xf32>
    %11 = arith.truncf %10 : vector<16x128xf32> to vector<16x128xbf16>
    %c0_8 = arith.constant 0 : index
    %c0_9 = arith.constant 0 : index
    %12 = vector.load %arg3[%c0_8, %c0_9] : memref<128x128xbf16, #tpu.memory_space<vmem>>, vector<128x128xbf16>
    %cst_10 = arith.constant dense<0.000000e+00> : vector<16x128xf32>
    %13 = tpu.matmul %11, %12, %cst_10 {dimension_numbers = #tpu.dot_dimension_numbers<[1], [0], [0], [1], [0, 0, 1, 1], [], []>} : vector<16x128xbf16>, vector<128x128xbf16>, vector<16x128xf32> -> vector<16x128xf32>
    %14 = vector.broadcast %1 : vector<1x128xf32> to vector<16x128xf32>
    %15 = arith.addf %13, %14 : vector<16x128xf32>
    %cst_11 = arith.constant 0.000000e+00 : f32
    %16 = vector.broadcast %cst_11 : f32 to vector<16x128xf32>
    %17 = arith.maximumf %15, %16 : vector<16x128xf32>
    %18 = arith.truncf %17 : vector<16x128xf32> to vector<16x128xbf16>
    %c0_12 = arith.constant 0 : index
    %c0_13 = arith.constant 0 : index
    %19 = vector.load %arg4[%c0_12, %c0_13] : memref<128x128xbf16, #tpu.memory_space<vmem>>, vector<128x128xbf16>
    %cst_14 = arith.constant dense<0.000000e+00> : vector<16x128xf32>
    %20 = tpu.matmul %18, %19, %cst_14 {dimension_numbers = #tpu.dot_dimension_numbers<[1], [0], [0], [1], [0, 0, 1, 1], [], []>} : vector<16x128xbf16>, vector<128x128xbf16>, vector<16x128xf32> -> vector<16x128xf32>
    %21 = vector.broadcast %2 : vector<1x128xf32> to vector<16x128xf32>
    %22 = arith.addf %20, %21 : vector<16x128xf32>
    %cst_15 = arith.constant dense<0xFF800000> : vector<16xf32>
    %23 = vector.multi_reduction <maximumf>, %22, %cst_15 [1] : vector<16x128xf32> to vector<16xf32>
    %24 = vector.shape_cast %23 : vector<16xf32> to vector<16x1xf32>
    %25 = vector.broadcast %24 : vector<16x1xf32> to vector<16x128xf32>
    %26 = arith.subf %22, %25 : vector<16x128xf32>
    %27 = math.exp %26 : vector<16x128xf32>
    %cst_16 = arith.constant dense<0.000000e+00> : vector<16xf32>
    %28 = vector.multi_reduction <add>, %27, %cst_16 [1] : vector<16x128xf32> to vector<16xf32>
    %29 = vector.shape_cast %28 : vector<16xf32> to vector<16x1xf32>
    %30 = math.log %29 : vector<16x1xf32>
    %31 = vector.broadcast %30 : vector<16x1xf32> to vector<16x128xf32>
    %32 = arith.subf %26, %31 : vector<16x128xf32>
    %33 = vector.extract_strided_slice %32 {offsets = [0, 0], sizes = [16, 16], strides = [1, 1]} : vector<16x128xf32> to vector<16x16xf32>
    %c0_17 = arith.constant 0 : index
    %c0_18 = arith.constant 0 : index
    %34 = vector.load %arg6[%c0_17, %c0_18] : memref<16x16xf32, #tpu.memory_space<vmem>>, vector<16x16xf32>
    tpu.vector_store %arg6[%c0_17, %c0_18], %33 {strides = array<i32>} : memref<16x16xf32, #tpu.memory_space<vmem>>, vector<16x16xf32>,
    return
  }
  func.func @transform_0(%arg0: i32) -> (i32, i32) {
    %c0_i32 = arith.constant 0 : i32
    %c0_i32_0 = arith.constant 0 : i32
    return %arg0, %c0_i32 : i32, i32
  }
  func.func @transform_1(%arg0: i32) -> (i32, i32) {
    %c0_i32 = arith.constant 0 : i32
    %c0_i32_0 = arith.constant 0 : i32
    %c0_i32_1 = arith.constant 0 : i32
    return %c0_i32, %c0_i32_0 : i32, i32
  }
  func.func @transform_2(%arg0: i32) -> (i32, i32) {
    %c0_i32 = arith.constant 0 : i32
    %c0_i32_0 = arith.constant 0 : i32
    %c0_i32_1 = arith.constant 0 : i32
    return %c0_i32, %c0_i32_0 : i32, i32
  }
  func.func @transform_3(%arg0: i32) -> (i32, i32) {
    %c0_i32 = arith.constant 0 : i32
    %c0_i32_0 = arith.constant 0 : i32
    %c0_i32_1 = arith.constant 0 : i32
    return %c0_i32, %c0_i32_0 : i32, i32
  }
  func.func @transform_4(%arg0: i32) -> (i32, i32) {
    %c0_i32 = arith.constant 0 : i32
    %c0_i32_0 = arith.constant 0 : i32
    %c0_i32_1 = arith.constant 0 : i32
    return %c0_i32, %c0_i32_0 : i32, i32
  }
  func.func @transform_5(%arg0: i32) -> (i32, i32) {
    %c0_i32 = arith.constant 0 : i32
    %c0_i32_0 = arith.constant 0 : i32
    return %arg0, %c0_i32 : i32, i32
  }
}

</mosaic_0001>

<llo_original>
// kernel: digit_classifier_forward.1
$region0: #{digit_classifier_forward.1}
  #allocation0 [shape = 'u32[]', space=smem, size = 0x4, offset = 0x4, fixed_abs, tag = 'smem constant byte address 0x4 - core index']
  #allocation1 [shape = 'u32[144,128]{1,0:T(1,128)}', space=vmem, size = 0x12000, scoped, tag = 'internal scratch']
  %s0 = inlined_call_operand.vmem [shape: f32[16,784], index: 0, kind: input, shape index: {}]
  %s1 = inlined_call_operand.hbm [shape: bf16[784,128], index: 1, kind: input, shape index: {}]
  %s2 = inlined_call_operand.vmem [shape: bf16[128,128], index: 2, kind: input, shape index: {}]
  %s3 = inlined_call_operand.vmem [shape: bf16[128,128], index: 3, kind: input, shape index: {}]
  %s4 = inlined_call_operand.vmem [shape: f32[8,128], index: 4, kind: input, shape index: {}]
  %s5 = inlined_call_operand.vmem [shape: f32[16,16], index: 5, kind: output, shape index: {}]
  %s6 = sld [smem:[#allocation0]]
  $region34: #{digit_classifier_forward.1} parent=0
    _
  %s8 = ssub.s32 1, %s6
  %s9 = scalar_select 0, %s8, %s6
  $region1: #{digit_classifier_forward.1} parent=0
    #allocation2 [shape = 'u8[200704]{0}', space=vmem, size = 0x31000, scoped, tag = 'input window, operand 1, single buffered']
    #allocation3 [shape = 's32[1]{0}', space=sflag, size = 0x4, scoped, tag = 'scoped memory for digit_classifier_forward.1']
    %10 = vsyncpa [#allocation3], 0
    // Predicated region
    $region2: #{digit_classifier_forward.1} parent=1 // pred_check
      _
    $region3: #{digit_classifier_forward.1} parent=1 // pred_check_branch
      %12 = sbr.rel (0) target = $region5
    $region4: #{digit_classifier_forward.1} parent=1 // pred_region
      _
    $region5: #{digit_classifier_forward.1} parent=1 // pred_fallthru
      _
    // Predicated region
    $region6: #{digit_classifier_forward.1} parent=1 // pred_check
      _
    $region7: #{digit_classifier_forward.1} parent=1 // pred_check_branch
      %14 = sbr.rel (0) target = $region9
    $region8: #{digit_classifier_forward.1} parent=1 // pred_region
      %s16 = ssub.s32 6272, 6272
      %17 = vsyncadd [#allocation3], %s16
      %s18 = sshll.u32 [#allocation2], 4
      %s19 = int_to_ptr.vmem [resolvable:$true] %s18
      %24 = dma.hbm_to_vmem [thread:$0]  %s1, 6272, %s19, [#allocation3], 64, 64, 4
    $region9: #{digit_classifier_forward.1} parent=1 // pred_fallthru
      _
    // Predicated region
    $region10: #{digit_classifier_forward.1} parent=1 // pred_check
      _
    $region11: #{digit_classifier_forward.1} parent=1 // pred_check_branch
      %26 = sbr.rel (0) target = $region13
    $region12: #{digit_classifier_forward.1} parent=1 // pred_region
      _
    $region13: #{digit_classifier_forward.1} parent=1 // pred_fallthru
      _
    // Predicated region
    $region14: #{digit_classifier_forward.1} parent=1 // pred_check
      _
    $region15: #{digit_classifier_forward.1} parent=1 // pred_check_branch
      %28 = sbr.rel (0) target = $region17
    $region16: #{digit_classifier_forward.1} parent=1 // pred_region
      _
    $region17: #{digit_classifier_forward.1} parent=1 // pred_fallthru
      _
    // Predicated region
    $region18: #{digit_classifier_forward.1} parent=1 // pred_check
      _
    $region19: #{digit_classifier_forward.1} parent=1 // pred_check_branch
      %30 = sbr.rel (0) target = $region21
    $region20: #{digit_classifier_forward.1} parent=1 // pred_region
      _
    $region21: #{digit_classifier_forward.1} parent=1 // pred_fallthru
      _
    // Predicated region
    $region22: #{digit_classifier_forward.1} parent=1 // pred_check
      _
    $region23: #{digit_classifier_forward.1} parent=1 // pred_check_branch
      %32 = sbr.rel (0) target = $region25
    $region24: #{digit_classifier_forward.1} parent=1 // pred_region
      %33 = dma.done [#allocation3], 6272
    $region25: #{digit_classifier_forward.1} parent=1 // pred_fallthru
      _
    %v35 = vld [vmem:[%s4] sm:$0x1]
    %v36 = vld [vmem:[%s4 + $0x1] sm:$0x1]
    %v37 = vld [vmem:[%s4 + $0x2] sm:$0x1]
    %v38 = vld [vmem:[%s0] sm:$0xff]
    %v39 = vld [vmem:[%s0 + $0x8] sm:$0xff]
    %v40 = vld [vmem:[%s0 + $0x10] sm:$0xff]
    %v41 = vld [vmem:[%s0 + $0x18] sm:$0xff]
    %v42 = vld [vmem:[%s0 + $0x20] sm:$0xff]
    %v43 = vld [vmem:[%s0 + $0x28] sm:$0xff]
    %v44 = vld [vmem:[%s0 + $0x30] sm:$0xff]
    %v45 = vld [vmem:[%s0 + $0x38] sm:$0xff]
    %v46 = vld [vmem:[%s0 + $0x40] sm:$0xff]
    %v47 = vld [vmem:[%s0 + $0x48] sm:$0xff]
    %v48 = vld [vmem:[%s0 + $0x50] sm:$0xff]
    %v49 = vld [vmem:[%s0 + $0x58] sm:$0xff]
    %v50 = vld [vmem:[%s0 + $0x60] sm:$0xff]
    %v51 = vld [vmem:[%s0 + $0x68] sm:$0xff]
    %v52 = vpack.c.bf16 %v45, %v38
    %v53 = vpack.c.bf16 %v46, %v39
    %v54 = vpack.c.bf16 %v47, %v40
    %v55 = vpack.c.bf16 %v48, %v41
    %v56 = vpack.c.bf16 %v49, %v42
    %v57 = vpack.c.bf16 %v50, %v43
    %v58 = vpack.c.bf16 %v51, %v44
    %v59 = vld [vmem:[#allocation2] sm:$0xf]
    %v60 = vld [vmem:[#allocation2 + $0x4] sm:$0xf]
    %v61 = vld [vmem:[#allocation2 + $0x8] sm:$0xf]
    %v62 = vld [vmem:[#allocation2 + $0xc] sm:$0xf]
    %v63 = vld [vmem:[#allocation2 + $0x10] sm:$0xf]
    %v64 = vld [vmem:[#allocation2 + $0x14] sm:$0xf]
    %v65 = vld [vmem:[#allocation2 + $0x18] sm:$0xf]
    %v66 = vld [vmem:[#allocation2 + $0x1c] sm:$0xf]
    %v67 = vld [vmem:[#allocation2 + $0x20] sm:$0xf]
    %v68 = vld [vmem:[#allocation2 + $0x24] sm:$0xf]
    %v69 = vld [vmem:[#allocation2 + $0x28] sm:$0xf]
    %v70 = vld [vmem:[#allocation2 + $0x2c] sm:$0xf]
    %v71 = vld [vmem:[#allocation2 + $0x30] sm:$0xf]
    %v72 = vld [vmem:[#allocation2 + $0x34] sm:$0xf]
    %v73 = vld [vmem:[#allocation2 + $0x38] sm:$0xf]
    %v74 = vld [vmem:[#allocation2 + $0x3c] sm:$0xf]
    %v75 = vld [vmem:[#allocation2 + $0x40] sm:$0xf]
    %v76 = vld [vmem:[#allocation2 + $0x44] sm:$0xf]
    %v77 = vld [vmem:[#allocation2 + $0x48] sm:$0xf]
    %v78 = vld [vmem:[#allocation2 + $0x4c] sm:$0xf]
    %v79 = vld [vmem:[#allocation2 + $0x50] sm:$0xf]
    %v80 = vld [vmem:[#allocation2 + $0x54] sm:$0xf]
    %v81 = vld [vmem:[#allocation2 + $0x58] sm:$0xf]
    %v82 = vld [vmem:[#allocation2 + $0x5c] sm:$0xf]
    %v83 = vld [vmem:[#allocation2 + $0x60] sm:$0xf]
    %v84 = vld [vmem:[#allocation2 + $0x64] sm:$0xf]
    %v85 = vld [vmem:[#allocation2 + $0x68] sm:$0xf]
    %v86 = vld [vmem:[#allocation2 + $0x6c] sm:$0xf]
    %v87 = vld [vmem:[#allocation2 + $0x70] sm:$0xf]
    %v88 = vld [vmem:[#allocation2 + $0x74] sm:$0xf]
    %v89 = vld [vmem:[#allocation2 + $0x78] sm:$0xf]
    %v90 = vld [vmem:[#allocation2 + $0x7c] sm:$0xf]
    %v91 = vld [vmem:[#allocation2 + $0x80] sm:$0xf]
    %v92 = vld [vmem:[#allocation2 + $0x84] sm:$0xf]
    %v93 = vld [vmem:[#allocation2 + $0x88] sm:$0xf]
    %v94 = vld [vmem:[#allocation2 + $0x8c] sm:$0xf]
    %v95 = vld [vmem:[#allocation2 + $0x90] sm:$0xf]
    %v96 = vld [vmem:[#allocation2 + $0x94] sm:$0xf]
    %v97 = vld [vmem:[#allocation2 + $0x98] sm:$0xf]
    %v98 = vld [vmem:[#allocation2 + $0x9c] sm:$0xf]
    %v99 = vld [vmem:[#allocation2 + $0xa0] sm:$0xf]
    %v100 = vld [vmem:[#allocation2 + $0xa4] sm:$0xf]
    %v101 = vld [vmem:[#allocation2 + $0xa8] sm:$0xf]
    %v102 = vld [vmem:[#allocation2 + $0xac] sm:$0xf]
    %v103 = vld [vmem:[#allocation2 + $0xb0] sm:$0xf]
    %v104 = vld [vmem:[#allocation2 + $0xb4] sm:$0xf]
    %v105 = vld [vmem:[#allocation2 + $0xb8] sm:$0xf]
    %v106 = vld [vmem:[#allocation2 + $0xbc] sm:$0xf]
    %v107 = vld [vmem:[#allocation2 + $0xc0] sm:$0xf]
    %v108 = vld [vmem:[#allocation2 + $0xc4] sm:$0xf]
    %v109 = vld [vmem:[#allocation2 + $0xc8] sm:$0xf]
    %v110 = vld [vmem:[#allocation2 + $0xcc] sm:$0xf]
    %v111 = vld [vmem:[#allocation2 + $0xd0] sm:$0xf]
    %v112 = vld [vmem:[#allocation2 + $0xd4] sm:$0xf]
    %v113 = vld [vmem:[#allocation2 + $0xd8] sm:$0xf]
    %v114 = vld [vmem:[#allocation2 + $0xdc] sm:$0xf]
    %v115 = vld [vmem:[#allocation2 + $0xe0] sm:$0xf]
    %v116 = vld [vmem:[#allocation2 + $0xe4] sm:$0xf]
    %v117 = vld [vmem:[#allocation2 + $0xe8] sm:$0xf]
    %v118 = vld [vmem:[#allocation2 + $0xec] sm:$0xf]
    %v119 = vld [vmem:[#allocation2 + $0xf0] sm:$0xf]
    %v120 = vld [vmem:[#allocation2 + $0xf4] sm:$0xf]
    %v121 = vld [vmem:[#allocation2 + $0xf8] sm:$0xf]
    %v122 = vld [vmem:[#allocation2 + $0xfc] sm:$0xf]
    %v123 = vld [vmem:[#allocation2 + $0x100] sm:$0xf]
    %v124 = vld [vmem:[#allocation2 + $0x104] sm:$0xf]
    %v125 = vld [vmem:[#allocation2 + $0x108] sm:$0xf]
    %v126 = vld [vmem:[#allocation2 + $0x10c] sm:$0xf]
    %v127 = vld [vmem:[#allocation2 + $0x110] sm:$0xf]
    %v128 = vld [vmem:[#allocation2 + $0x114] sm:$0xf]
    %v129 = vld [vmem:[#allocation2 + $0x118] sm:$0xf]
    %v130 = vld [vmem:[#allocation2 + $0x11c] sm:$0xf]
    %v131 = vld [vmem:[#allocation2 + $0x120] sm:$0xf]
    %v132 = vld [vmem:[#allocation2 + $0x124] sm:$0xf]
    %v133 = vld [vmem:[#allocation2 + $0x128] sm:$0xf]
    %v134 = vld [vmem:[#allocation2 + $0x12c] sm:$0xf]
    %v135 = vld [vmem:[#allocation2 + $0x130] sm:$0xf]
    %v136 = vld [vmem:[#allocation2 + $0x134] sm:$0xf]
    %v137 = vld [vmem:[#allocation2 + $0x138] sm:$0xf]
    %v138 = vld [vmem:[#allocation2 + $0x13c] sm:$0xf]
    %v139 = vld [vmem:[#allocation2 + $0x140] sm:$0xf]
    %v140 = vld [vmem:[#allocation2 + $0x144] sm:$0xf]
    %v141 = vld [vmem:[#allocation2 + $0x148] sm:$0xf]
    %v142 = vld [vmem:[#allocation2 + $0x14c] sm:$0xf]
    %v143 = vld [vmem:[#allocation2 + $0x150] sm:$0xf]
    %v144 = vld [vmem:[#allocation2 + $0x154] sm:$0xf]
    %v145 = vld [vmem:[#allocation2 + $0x158] sm:$0xf]
    %v146 = vld [vmem:[#allocation2 + $0x15c] sm:$0xf]
    %v147 = vld [vmem:[#allocation2 + $0x160] sm:$0xf]
    %v148 = vld [vmem:[#allocation2 + $0x164] sm:$0xf]
    %v149 = vld [vmem:[#allocation2 + $0x168] sm:$0xf]
    %v150 = vld [vmem:[#allocation2 + $0x16c] sm:$0xf]
    %v151 = vld [vmem:[#allocation2 + $0x170] sm:$0xf]
    %v152 = vld [vmem:[#allocation2 + $0x174] sm:$0xf]
    %v153 = vld [vmem:[#allocation2 + $0x178] sm:$0xf]
    %v154 = vld [vmem:[#allocation2 + $0x17c] sm:$0xf]
    %v155 = vld [vmem:[#allocation2 + $0x180] sm:$0xf]
    %v156 = vld [vmem:[#allocation2 + $0x184] sm:$0xf]
    %v157 = vlaneseq
    %v158 = vshrl.u32 %v157, 7
    %v159 = vsub.s32 0, %v158
    %v160 = vrot.slane %v35, %v159
    %v259 = vunpack.c.l.b16 %v59
    %v260 = vunpack.c.l.b16 %v60
    %v261 = vunpack.c.l.b16 %v61
    %v262 = vunpack.c.l.b16 %v62
    %v263 = vunpack.c.l.b16 %v63
    %v264 = vunpack.c.l.b16 %v64
    %v265 = vunpack.c.l.b16 %v65
    %v266 = vunpack.c.l.b16 %v66
    %v267 = vunpack.c.l.b16 %v67
    %v268 = vunpack.c.l.b16 %v68
    %v269 = vunpack.c.l.b16 %v69
    %v270 = vunpack.c.l.b16 %v70
    %v271 = vunpack.c.l.b16 %v71
    %v272 = vunpack.c.l.b16 %v72
    %v273 = vunpack.c.l.b16 %v73
    %v274 = vunpack.c.l.b16 %v74
    %v275 = vunpack.c.l.b16 %v75
    %v276 = vunpack.c.l.b16 %v76
    %v277 = vunpack.c.l.b16 %v77
    %v278 = vunpack.c.l.b16 %v78
    %v279 = vunpack.c.l.b16 %v79
    %v280 = vunpack.c.l.b16 %v80
    %v281 = vunpack.c.l.b16 %v81
    %v282 = vunpack.c.l.b16 %v82
    %v283 = vunpack.c.l.b16 %v83
    %v284 = vunpack.c.l.b16 %v84
    %v285 = vunpack.c.l.b16 %v85
    %v286 = vunpack.c.l.b16 %v86
    %v287 = vunpack.c.l.b16 %v87
    %v288 = vunpack.c.l.b16 %v88
    %v289 = vunpack.c.l.b16 %v89
    %v290 = vunpack.c.l.b16 %v90
    %v291 = vunpack.c.l.b16 %v91
    %v292 = vunpack.c.l.b16 %v92
    %v293 = vunpack.c.l.b16 %v93
    %v294 = vunpack.c.l.b16 %v94
    %v295 = vunpack.c.l.b16 %v95
    %v296 = vunpack.c.l.b16 %v96
    %v297 = vunpack.c.l.b16 %v97
    %v298 = vunpack.c.l.b16 %v98
    %v299 = vunpack.c.l.b16 %v99
    %v300 = vunpack.c.l.b16 %v100
    %v301 = vunpack.c.l.b16 %v101
    %v302 = vunpack.c.l.b16 %v102
    %v303 = vunpack.c.l.b16 %v103
    %v304 = vunpack.c.l.b16 %v104
    %v305 = vunpack.c.l.b16 %v105
    %v306 = vunpack.c.l.b16 %v106
    %v307 = vunpack.c.l.b16 %v107
    %v308 = vunpack.c.l.b16 %v108
    %v309 = vunpack.c.l.b16 %v109
    %v310 = vunpack.c.l.b16 %v110
    %v311 = vunpack.c.l.b16 %v111
    %v312 = vunpack.c.l.b16 %v112
    %v313 = vunpack.c.l.b16 %v113
    %v314 = vunpack.c.l.b16 %v114
    %v315 = vunpack.c.l.b16 %v115
    %v316 = vunpack.c.l.b16 %v116
    %v317 = vunpack.c.l.b16 %v117
    %v318 = vunpack.c.l.b16 %v118
    %v319 = vunpack.c.l.b16 %v119
    %v320 = vunpack.c.l.b16 %v120
    %v321 = vunpack.c.l.b16 %v121
    %v322 = vunpack.c.l.b16 %v122
    %v323 = vunpack.c.l.b16 %v123
    %v324 = vunpack.c.l.b16 %v124
    %v325 = vunpack.c.l.b16 %v125
    %v326 = vunpack.c.l.b16 %v126
    %v327 = vunpack.c.l.b16 %v127
    %v328 = vunpack.c.l.b16 %v128
    %v329 = vunpack.c.l.b16 %v129
    %v330 = vunpack.c.l.b16 %v130
    %v331 = vunpack.c.l.b16 %v131
    %v332 = vunpack.c.l.b16 %v132
    %v333 = vunpack.c.l.b16 %v133
    %v334 = vunpack.c.l.b16 %v134
    %v335 = vunpack.c.l.b16 %v135
    %v336 = vunpack.c.l.b16 %v136
    %v337 = vunpack.c.l.b16 %v137
    %v338 = vunpack.c.l.b16 %v138
    %v339 = vunpack.c.l.b16 %v139
    %v340 = vunpack.c.l.b16 %v140
    %v341 = vunpack.c.l.b16 %v141
    %v342 = vunpack.c.l.b16 %v142
    %v343 = vunpack.c.l.b16 %v143
    %v344 = vunpack.c.l.b16 %v144
    %v345 = vunpack.c.l.b16 %v145
    %v346 = vunpack.c.l.b16 %v146
    %v347 = vunpack.c.l.b16 %v147
    %v348 = vunpack.c.l.b16 %v148
    %v349 = vunpack.c.l.b16 %v149
    %v350 = vunpack.c.l.b16 %v150
    %v351 = vunpack.c.l.b16 %v151
    %v352 = vunpack.c.l.b16 %v152
    %v353 = vunpack.c.l.b16 %v153
    %v354 = vunpack.c.l.b16 %v154
    %v355 = vunpack.c.l.b16 %v155
    %v356 = vunpack.c.l.b16 %v156
    %v357 = vpack.c.b16 %v260, %v259
    %v358 = vpack.c.b16 %v262, %v261
    %v359 = vpack.c.b16 %v264, %v263
    %v360 = vpack.c.b16 %v266, %v265
    %v361 = vpack.c.b16 %v268, %v267
    %v362 = vpack.c.b16 %v270, %v269
    %v363 = vpack.c.b16 %v272, %v271
    %v364 = vpack.c.b16 %v274, %v273
    %v365 = vpack.c.b16 %v276, %v275
    %v366 = vpack.c.b16 %v278, %v277
    %v367 = vpack.c.b16 %v280, %v279
    %v368 = vpack.c.b16 %v282, %v281
    %v369 = vpack.c.b16 %v284, %v283
    %v370 = vpack.c.b16 %v286, %v285
    %v371 = vpack.c.b16 %v288, %v287
    %v372 = vpack.c.b16 %v290, %v289
    %v373 = vpack.c.b16 %v292, %v291
    %v374 = vpack.c.b16 %v294, %v293
    %v375 = vpack.c.b16 %v296, %v295
    %v376 = vpack.c.b16 %v298, %v297
    %v377 = vpack.c.b16 %v300, %v299
    %v378 = vpack.c.b16 %v302, %v301
    %v379 = vpack.c.b16 %v304, %v303
    %v380 = vpack.c.b16 %v306, %v305
    %v381 = vpack.c.b16 %v308, %v307
    %v382 = vpack.c.b16 %v310, %v309
    %v383 = vpack.c.b16 %v312, %v311
    %v384 = vpack.c.b16 %v314, %v313
    %v385 = vpack.c.b16 %v316, %v315
    %v386 = vpack.c.b16 %v318, %v317
    %v387 = vpack.c.b16 %v320, %v319
    %v388 = vpack.c.b16 %v322, %v321
    %v389 = vpack.c.b16 %v324, %v323
    %v390 = vpack.c.b16 %v326, %v325
    %v391 = vpack.c.b16 %v328, %v327
    %v392 = vpack.c.b16 %v330, %v329
    %v393 = vpack.c.b16 %v332, %v331
    %v394 = vpack.c.b16 %v334, %v333
    %v395 = vpack.c.b16 %v336, %v335
    %v396 = vpack.c.b16 %v338, %v337
    %v397 = vpack.c.b16 %v340, %v339
    %v398 = vpack.c.b16 %v342, %v341
    %v399 = vpack.c.b16 %v344, %v343
    %v400 = vpack.c.b16 %v346, %v345
    %v401 = vpack.c.b16 %v348, %v347
    %v402 = vpack.c.b16 %v350, %v349
    %v403 = vpack.c.b16 %v352, %v351
    %v404 = vpack.c.b16 %v354, %v353
    %v405 = vpack.c.b16 %v356, %v355
    %vm455 = vcmask 130048
    %v457 = vsel %vm455, %v58, 0
    %459 = vmatprep.subr.bf16.mxu0 0
    %460 = vmatpush1.bf16.msra.mxu0 %v357
    %461 = vmatprep.subr.bf16.mxu0 0
    %462 = vmatpush1.bf16.msra.mxu0 %v358
    %463 = vmatprep.subr.bf16.mxu0 0
    %464 = vmatpush1.bf16.msra.mxu0 %v359
    %465 = vmatprep.subr.bf16.mxu0 0
    %466 = vmatpush1.bf16.msra.mxu0 %v360
    %467 = vmatprep.subr.bf16.mxu0 0
    %468 = vmatpush1.bf16.msra.mxu0 %v361
    %469 = vmatprep.subr.bf16.mxu0 0
    %470 = vmatpush1.bf16.msra.mxu0 %v362
    %471 = vmatprep.subr.bf16.mxu0 0
    %472 = vmatpush1.bf16.msra.mxu0 %v363
    %473 = vmatprep.subr.bf16.mxu0 0
    %474 = vmatpush1.bf16.msra.mxu0 %v364
    %475 = vmatprep.subr.bf16.mxu0 0
    %476 = vmatpush1.bf16.msra.mxu0 %v365
    %477 = vmatprep.subr.bf16.mxu0 0
    %478 = vmatpush1.bf16.msra.mxu0 %v366
    %479 = vmatprep.subr.bf16.mxu0 0
    %480 = vmatpush1.bf16.msra.mxu0 %v367
    %481 = vmatprep.subr.bf16.mxu0 0
    %482 = vmatpush1.bf16.msra.mxu0 %v368
    %483 = vmatprep.subr.bf16.mxu0 0
    %484 = vmatpush1.bf16.msra.mxu0 %v369
    %485 = vmatprep.subr.bf16.mxu0 0
    %486 = vmatpush1.bf16.msra.mxu0 %v370
    %487 = vmatprep.subr.bf16.mxu0 0
    %488 = vmatpush1.bf16.msra.mxu0 %v371
    %489 = vmatprep.subr.bf16.mxu0 0
    %490 = vmatpush1.bf16.msra.mxu0 %v372
    %491 = vmatprep.mubr.bf16.mxu0 %v53
    %492 = vmatmul.mubr.bf16.gmra.mrb[0].mxu0 %v52
    %v493 = vpop.f32.mrb[0].mxu0
    %v494 = vadd.f32 %v160, %v493
    %v495 = vpop.f32.mrb[0].mxu0
    %v496 = vpop.f32.mrb[0].mxu0
    %v497 = vadd.f32 %v160, %v496
    %v498 = vpop.f32.mrb[0].mxu0
    %499 = vdwg.mxu0
    %500 = vmatprep.subr.bf16.mxu0 0
    %501 = vmatpush1.bf16.msra.mxu0 %v373
    %502 = vmatprep.subr.bf16.mxu0 0
    %503 = vmatpush1.bf16.msra.mxu0 %v374
    %504 = vmatprep.subr.bf16.mxu0 0
    %505 = vmatpush1.bf16.msra.mxu0 %v375
    %506 = vmatprep.subr.bf16.mxu0 0
    %507 = vmatpush1.bf16.msra.mxu0 %v376
    %508 = vmatprep.subr.bf16.mxu0 0
    %509 = vmatpush1.bf16.msra.mxu0 %v377
    %510 = vmatprep.subr.bf16.mxu0 0
    %511 = vmatpush1.bf16.msra.mxu0 %v378
    %512 = vmatprep.subr.bf16.mxu0 0
    %513 = vmatpush1.bf16.msra.mxu0 %v379
    %514 = vmatprep.subr.bf16.mxu0 0
    %515 = vmatpush1.bf16.msra.mxu0 %v380
    %516 = vmatprep.subr.bf16.mxu0 0
    %517 = vmatpush1.bf16.msra.mxu0 %v381
    %518 = vmatprep.subr.bf16.mxu0 0
    %519 = vmatpush1.bf16.msra.mxu0 %v382
    %520 = vmatprep.subr.bf16.mxu0 0
    %521 = vmatpush1.bf16.msra.mxu0 %v383
    %522 = vmatprep.subr.bf16.mxu0 0
    %523 = vmatpush1.bf16.msra.mxu0 %v384
    %524 = vmatprep.subr.bf16.mxu0 0
    %525 = vmatpush1.bf16.msra.mxu0 %v385
    %526 = vmatprep.subr.bf16.mxu0 0
    %527 = vmatpush1.bf16.msra.mxu0 %v386
    %528 = vmatprep.subr.bf16.mxu0 0
    %529 = vmatpush1.bf16.msra.mxu0 %v387
    %530 = vmatprep.subr.bf16.mxu0 0
    %531 = vmatpush1.bf16.msra.mxu0 %v388
    %532 = vmatprep.mubr.bf16.mxu0 %v55
    %533 = vmatmul.mubr.bf16.gmra.mrb[0].mxu0 %v54
    %v534 = vpop.f32.mrb[0].mxu0
    %v535 = vadd.f32 %v494, %v534
    %v536 = vpop.f32.mrb[0].mxu0
    %v537 = vpop.f32.mrb[0].mxu0
    %v538 = vadd.f32 %v497, %v537
    %v539 = vpop.f32.mrb[0].mxu0
    %540 = vdwg.mxu0
    %541 = vmatprep.subr.bf16.mxu0 0
    %542 = vmatpush1.bf16.msra.mxu0 %v389
    %543 = vmatprep.subr.bf16.mxu0 0
    %544 = vmatpush1.bf16.msra.mxu0 %v390
    %545 = vmatprep.subr.bf16.mxu0 0
    %546 = vmatpush1.bf16.msra.mxu0 %v391
    %547 = vmatprep.subr.bf16.mxu0 0
    %548 = vmatpush1.bf16.msra.mxu0 %v392
    %549 = vmatprep.subr.bf16.mxu0 0
    %550 = vmatpush1.bf16.msra.mxu0 %v393
    %551 = vmatprep.subr.bf16.mxu0 0
    %552 = vmatpush1.bf16.msra.mxu0 %v394
    %553 = vmatprep.subr.bf16.mxu0 0
    %554 = vmatpush1.bf16.msra.mxu0 %v395
    %555 = vmatprep.subr.bf16.mxu0 0
    %556 = vmatpush1.bf16.msra.mxu0 %v396
    %557 = vmatprep.subr.bf16.mxu0 0
    %558 = vmatpush1.bf16.msra.mxu0 %v397
    %559 = vmatprep.subr.bf16.mxu0 0
    %560 = vmatpush1.bf16.msra.mxu0 %v398
    %561 = vmatprep.subr.bf16.mxu0 0
    %562 = vmatpush1.bf16.msra.mxu0 %v399
    %563 = vmatprep.subr.bf16.mxu0 0
    %564 = vmatpush1.bf16.msra.mxu0 %v400
    %565 = vmatprep.subr.bf16.mxu0 0
    %566 = vmatpush1.bf16.msra.mxu0 %v401
    %567 = vmatprep.subr.bf16.mxu0 0
    %568 = vmatpush1.bf16.msra.mxu0 %v402
    %569 = vmatprep.subr.bf16.mxu0 0
    %570 = vmatpush1.bf16.msra.mxu0 %v403
    %571 = vmatprep.subr.bf16.mxu0 0
    %572 = vmatpush1.bf16.msra.mxu0 %v404
    %573 = vmatprep.mubr.bf16.mxu0 %v57
    %574 = vmatmul.mubr.bf16.gmra.mrb[0].mxu0 %v56
    %v575 = vpop.f32.mrb[0].mxu0
    %v576 = vadd.f32 %v535, %v575
    %v577 = vpop.f32.mrb[0].mxu0
    %v578 = vpop.f32.mrb[0].mxu0
    %v579 = vadd.f32 %v538, %v578
    %v580 = vpop.f32.mrb[0].mxu0
    %581 = vdwg.mxu0
    %582 = vmatprep.subr.bf16.mxu0 0
    %583 = vmatpush1.bf16.msra.mxu0 %v405
    %584 = vmatprep.subr.bf16.mxu0 0
    %585 = vmatpush1.bf16.msra.mxu0 0
    %586 = vmatprep.subr.bf16.mxu0 0
    %587 = vmatpush1.bf16.msra.mxu0 0
    %588 = vmatprep.subr.bf16.mxu0 0
    %589 = vmatpush1.bf16.msra.mxu0 0
    %590 = vmatprep.subr.bf16.mxu0 0
    %591 = vmatpush1.bf16.msra.mxu0 0
    %592 = vmatprep.subr.bf16.mxu0 0
    %593 = vmatpush1.bf16.msra.mxu0 0
    %594 = vmatprep.subr.bf16.mxu0 0
    %595 = vmatpush1.bf16.msra.mxu0 0
    %596 = vmatprep.subr.bf16.mxu0 0
    %597 = vmatpush1.bf16.msra.mxu0 0
    %598 = vmatprep.subr.bf16.mxu0 0
    %599 = vmatpush1.bf16.msra.mxu0 0
    %600 = vmatprep.subr.bf16.mxu0 0
    %601 = vmatpush1.bf16.msra.mxu0 0
    %602 = vmatprep.subr.bf16.mxu0 0
    %603 = vmatpush1.bf16.msra.mxu0 0
    %604 = vmatprep.subr.bf16.mxu0 0
    %605 = vmatpush1.bf16.msra.mxu0 0
    %606 = vmatprep.subr.bf16.mxu0 0
    %607 = vmatpush1.bf16.msra.mxu0 0
    %608 = vmatprep.subr.bf16.mxu0 0
    %609 = vmatpush1.bf16.msra.mxu0 0
    %610 = vmatprep.subr.bf16.mxu0 0
    %611 = vmatpush1.bf16.msra.mxu0 0
    %612 = vmatprep.subr.bf16.mxu0 0
    %613 = vmatpush1.bf16.msra.mxu0 0
    %614 = vmatprep.mubr.bf16.mxu0 0
    %615 = vmatmul.mubr.bf16.gmra.mrb[0].mxu0 %v457
    %v616 = vpop.f32.mrb[0].mxu0
    %v617 = vadd.f32 %v576, %v616
    %v618 = vpop.f32.mrb[0].mxu0
    %v619 = vpop.f32.mrb[0].mxu0
    %v620 = vadd.f32 %v579, %v619
    %v621 = vpop.f32.mrb[0].mxu0
    %622 = vdwg.mxu0
    %v623 = vmax.f32 %v617, 0.0
    %v624 = vmax.f32 %v620, 0.0
    %v625 = vpack.c.bf16 %v624, %v623
    %v626 = vld [vmem:[%s2] sm:$0xf]
    %v627 = vld [vmem:[%s2 + $0x4] sm:$0xf]
    %v628 = vld [vmem:[%s2 + $0x8] sm:$0xf]
    %v629 = vld [vmem:[%s2 + $0xc] sm:$0xf]
    %v630 = vld [vmem:[%s2 + $0x10] sm:$0xf]
    %v631 = vld [vmem:[%s2 + $0x14] sm:$0xf]
    %v632 = vld [vmem:[%s2 + $0x18] sm:$0xf]
    %v633 = vld [vmem:[%s2 + $0x1c] sm:$0xf]
    %v634 = vld [vmem:[%s2 + $0x20] sm:$0xf]
    %v635 = vld [vmem:[%s2 + $0x24] sm:$0xf]
    %v636 = vld [vmem:[%s2 + $0x28] sm:$0xf]
    %v637 = vld [vmem:[%s2 + $0x2c] sm:$0xf]
    %v638 = vld [vmem:[%s2 + $0x30] sm:$0xf]
    %v639 = vld [vmem:[%s2 + $0x34] sm:$0xf]
    %v640 = vld [vmem:[%s2 + $0x38] sm:$0xf]
    %v641 = vld [vmem:[%s2 + $0x3c] sm:$0xf]
    %v642 = vlaneseq
    %v643 = vshrl.u32 %v642, 7
    %v644 = vsub.s32 0, %v643
    %v645 = vrot.slane %v36, %v644
    %v662 = vunpack.c.l.b16 %v626
    %v663 = vunpack.c.l.b16 %v627
    %v664 = vunpack.c.l.b16 %v628
    %v665 = vunpack.c.l.b16 %v629
    %v666 = vunpack.c.l.b16 %v630
    %v667 = vunpack.c.l.b16 %v631
    %v668 = vunpack.c.l.b16 %v632
    %v669 = vunpack.c.l.b16 %v633
    %v670 = vunpack.c.l.b16 %v634
    %v671 = vunpack.c.l.b16 %v635
    %v672 = vunpack.c.l.b16 %v636
    %v673 = vunpack.c.l.b16 %v637
    %v674 = vunpack.c.l.b16 %v638
    %v675 = vunpack.c.l.b16 %v639
    %v676 = vunpack.c.l.b16 %v640
    %v677 = vunpack.c.l.b16 %v641
    %v678 = vpack.c.b16 %v663, %v662
    %v679 = vpack.c.b16 %v665, %v664
    %v680 = vpack.c.b16 %v667, %v666
    %v681 = vpack.c.b16 %v669, %v668
    %v682 = vpack.c.b16 %v671, %v670
    %v683 = vpack.c.b16 %v673, %v672
    %v684 = vpack.c.b16 %v675, %v674
    %v685 = vpack.c.b16 %v677, %v676
    %694 = vmatprep.subr.bf16.mxu0 0
    %695 = vmatpush1.bf16.msra.mxu0 %v678
    %696 = vmatprep.subr.bf16.mxu0 0
    %697 = vmatpush1.bf16.msra.mxu0 %v679
    %698 = vmatprep.subr.bf16.mxu0 0
    %699 = vmatpush1.bf16.msra.mxu0 %v680
    %700 = vmatprep.subr.bf16.mxu0 0
    %701 = vmatpush1.bf16.msra.mxu0 %v681
    %702 = vmatprep.subr.bf16.mxu0 0
    %703 = vmatpush1.bf16.msra.mxu0 %v682
    %704 = vmatprep.subr.bf16.mxu0 0
    %705 = vmatpush1.bf16.msra.mxu0 %v683
    %706 = vmatprep.subr.bf16.mxu0 0
    %707 = vmatpush1.bf16.msra.mxu0 %v684
    %708 = vmatprep.subr.bf16.mxu0 0
    %709 = vmatpush1.bf16.msra.mxu0 %v685
    %710 = vmatprep.subr.bf16.mxu0 0
    %711 = vmatpush1.bf16.msra.mxu0 0
    %712 = vmatprep.subr.bf16.mxu0 0
    %713 = vmatpush1.bf16.msra.mxu0 0
    %714 = vmatprep.subr.bf16.mxu0 0
    %715 = vmatpush1.bf16.msra.mxu0 0
    %716 = vmatprep.subr.bf16.mxu0 0
    %717 = vmatpush1.bf16.msra.mxu0 0
    %718 = vmatprep.subr.bf16.mxu0 0
    %719 = vmatpush1.bf16.msra.mxu0 0
    %720 = vmatprep.subr.bf16.mxu0 0
    %721 = vmatpush1.bf16.msra.mxu0 0
    %722 = vmatprep.subr.bf16.mxu0 0
    %723 = vmatpush1.bf16.msra.mxu0 0
    %724 = vmatprep.subr.bf16.mxu0 0
    %725 = vmatpush1.bf16.msra.mxu0 0
    %726 = vmatprep.mubr.bf16.mxu0 0
    %727 = vmatmul.mubr.bf16.gmra.mrb[0].mxu0 %v625
    %v728 = vpop.f32.mrb[0].mxu0
    %v729 = vadd.f32 %v645, %v728
    %v730 = vpop.f32.mrb[0].mxu0
    %v731 = vpop.f32.mrb[0].mxu0
    %v732 = vadd.f32 %v645, %v731
    %v733 = vpop.f32.mrb[0].mxu0
    %734 = vdwg.mxu0
    %v735 = vmax.f32 %v729, 0.0
    %v736 = vmax.f32 %v732, 0.0
    %v737 = vpack.c.bf16 %v736, %v735
    %v738 = vld [vmem:[%s3] sm:$0xf]
    %v739 = vld [vmem:[%s3 + $0x4] sm:$0xf]
    %v740 = vld [vmem:[%s3 + $0x8] sm:$0xf]
    %v741 = vld [vmem:[%s3 + $0xc] sm:$0xf]
    %v742 = vld [vmem:[%s3 + $0x10] sm:$0xf]
    %v743 = vld [vmem:[%s3 + $0x14] sm:$0xf]
    %v744 = vld [vmem:[%s3 + $0x18] sm:$0xf]
    %v745 = vld [vmem:[%s3 + $0x1c] sm:$0xf]
    %v746 = vld [vmem:[%s3 + $0x20] sm:$0xf]
    %v747 = vld [vmem:[%s3 + $0x24] sm:$0xf]
    %v748 = vld [vmem:[%s3 + $0x28] sm:$0xf]
    %v749 = vld [vmem:[%s3 + $0x2c] sm:$0xf]
    %v750 = vld [vmem:[%s3 + $0x30] sm:$0xf]
    %v751 = vld [vmem:[%s3 + $0x34] sm:$0xf]
    %v752 = vld [vmem:[%s3 + $0x38] sm:$0xf]
    %v753 = vld [vmem:[%s3 + $0x3c] sm:$0xf]
    %v754 = vlaneseq
    %v755 = vshrl.u32 %v754, 7
    %v756 = vsub.s32 0, %v755
    %v757 = vrot.slane %v37, %v756
    %v774 = vunpack.c.l.b16 %v738
    %v775 = vunpack.c.l.b16 %v739
    %v776 = vunpack.c.l.b16 %v740
    %v777 = vunpack.c.l.b16 %v741
    %v778 = vunpack.c.l.b16 %v742
    %v779 = vunpack.c.l.b16 %v743
    %v780 = vunpack.c.l.b16 %v744
    %v781 = vunpack.c.l.b16 %v745
    %v782 = vunpack.c.l.b16 %v746
    %v783 = vunpack.c.l.b16 %v747
    %v784 = vunpack.c.l.b16 %v748
    %v785 = vunpack.c.l.b16 %v749
    %v786 = vunpack.c.l.b16 %v750
    %v787 = vunpack.c.l.b16 %v751
    %v788 = vunpack.c.l.b16 %v752
    %v789 = vunpack.c.l.b16 %v753
    %v790 = vpack.c.b16 %v775, %v774
    %v791 = vpack.c.b16 %v777, %v776
    %v792 = vpack.c.b16 %v779, %v778
    %v793 = vpack.c.b16 %v781, %v780
    %v794 = vpack.c.b16 %v783, %v782
    %v795 = vpack.c.b16 %v785, %v784
    %v796 = vpack.c.b16 %v787, %v786
    %v797 = vpack.c.b16 %v789, %v788
    %806 = vmatprep.subr.bf16.mxu0 0
    %807 = vmatpush1.bf16.msra.mxu0 %v790
    %808 = vmatprep.subr.bf16.mxu0 0
    %809 = vmatpush1.bf16.msra.mxu0 %v791
    %810 = vmatprep.subr.bf16.mxu0 0
    %811 = vmatpush1.bf16.msra.mxu0 %v792
    %812 = vmatprep.subr.bf16.mxu0 0
    %813 = vmatpush1.bf16.msra.mxu0 %v793
    %814 = vmatprep.subr.bf16.mxu0 0
    %815 = vmatpush1.bf16.msra.mxu0 %v794
    %816 = vmatprep.subr.bf16.mxu0 0
    %817 = vmatpush1.bf16.msra.mxu0 %v795
    %818 = vmatprep.subr.bf16.mxu0 0
    %819 = vmatpush1.bf16.msra.mxu0 %v796
    %820 = vmatprep.subr.bf16.mxu0 0
    %821 = vmatpush1.bf16.msra.mxu0 %v797
    %822 = vmatprep.subr.bf16.mxu0 0
    %823 = vmatpush1.bf16.msra.mxu0 0
    %824 = vmatprep.subr.bf16.mxu0 0
    %825 = vmatpush1.bf16.msra.mxu0 0
    %826 = vmatprep.subr.bf16.mxu0 0
    %827 = vmatpush1.bf16.msra.mxu0 0
    %828 = vmatprep.subr.bf16.mxu0 0
    %829 = vmatpush1.bf16.msra.mxu0 0
    %830 = vmatprep.subr.bf16.mxu0 0
    %831 = vmatpush1.bf16.msra.mxu0 0
    %832 = vmatprep.subr.bf16.mxu0 0
    %833 = vmatpush1.bf16.msra.mxu0 0
    %834 = vmatprep.subr.bf16.mxu0 0
    %835 = vmatpush1.bf16.msra.mxu0 0
    %836 = vmatprep.subr.bf16.mxu0 0
    %837 = vmatpush1.bf16.msra.mxu0 0
    %838 = vmatprep.mubr.bf16.mxu0 0
    %839 = vmatmul.mubr.bf16.gmra.mrb[0].mxu0 %v737
    %v840 = vpop.f32.mrb[0].mxu0
    %v841 = vadd.f32 %v757, %v840
    %v842 = vpop.f32.mrb[0].mxu0
    %v843 = vpop.f32.mrb[0].mxu0
    %v844 = vadd.f32 %v757, %v843
    %v845 = vpop.f32.mrb[0].mxu0
    %846 = vdwg.mxu0
    %847 = vmax.xlane.f32.xlu0 %v841
    %v848 = vpop.xlane.xlu0 %847
    %849 = vmax.xlane.f32.xlu0 %v844
    %v850 = vpop.xlane.xlu0 %849
    %v851 = vsub.f32 %v841, %v848
    %v852 = vsub.f32 %v844, %v850
    %v853 = vmul.f32 %v851, 1.442695
    %v854 = vpow.pop %v853
    %v855 = vmul.f32 %v852, 1.442695
    %v856 = vpow.pop %v855
    %857 = vadd.xlane.f32.xlu0 %v854
    %v858 = vpop.xlane.xlu0 %857
    %859 = vadd.xlane.f32.xlu0 %v856
    %v860 = vpop.xlane.xlu0 %859
    %v861 = vlog2.pop %v858
    %v862 = vmul.f32 %v861, 0.6931472
    %v863 = vlog2.pop %v860
    %v864 = vmul.f32 %v863, 0.6931472
    %v865 = vsub.f32 %v851, %v862
    %v866 = vsub.f32 %v852, %v864
    %867 = vst.msk [vmem:[%s5] sm:$0xff] %vm455, %v865
    %868 = vst.msk [vmem:[%s5 + $0x8] sm:$0xff] %vm455, %v866
    // Predicated region
    $region26: #{digit_classifier_forward.1} parent=1 // pred_check
      _
    $region27: #{digit_classifier_forward.1} parent=1 // pred_check_branch
      %870 = sbr.rel (0) target = $region29
    $region28: #{digit_classifier_forward.1} parent=1 // pred_region
      _
    $region29: #{digit_classifier_forward.1} parent=1 // pred_fallthru
      _
    // Predicated region
    $region30: #{digit_classifier_forward.1} parent=1 // pred_check
      _
    $region31: #{digit_classifier_forward.1} parent=1 // pred_check_branch
      %872 = sbr.rel (0) target = $region33
    $region32: #{digit_classifier_forward.1} parent=1 // pred_region
      _
    $region33: #{digit_classifier_forward.1} parent=1 // pred_fallthru
      _
    %873 = vsyncpa [#allocation3], 1

</llo_original>
